<compile_context>
chip_gen: v5e
topology: v5e:2x2
jax: 0.10.0
libtpu: 0.0.40
codegen_flags: <defaults>
</compile_context>

<pallas_src>
import numpy as np
import jax
import jax.numpy as jnp
from jax.experimental import pallas as pl
from jax.experimental.pallas import tpu as pltpu

TWO_PI = float(2.0 * np.pi)
INV_TWO_PI = float(1.0 / (2.0 * np.pi))
_NUM_CONSTS = 10  # packed per-group constants (see wrapper)


def _hh2_kernel(c_ref, z_ref, o_ref):
    """One tile.

    c_ref : (1, G, 10)       hoisted per-group constants
    z_ref : (bn, 2, G, tl)   input  (half 0 = x, half 1 = y)
    o_ref : (bn, 2, G, tl)   output (half 0 = a, half 1 = b)
    """
    x = z_ref[:, 0, :, :]            # (bn, G, tl)
    y = z_ref[:, 1, :, :]            # (bn, G, tl)

    c = c_ref[...]                   # (1, G, 10); (1, G, 1) columns broadcast
    half_t0 = c[:, :, 0:1]
    ang1 = c[:, :, 1:2]
    ang2 = c[:, :, 2:3]
    ang3 = c[:, :, 3:4]
    cos01 = c[:, :, 4:5]
    sin01 = c[:, :, 5:6]
    cos2 = c[:, :, 6:7]
    sin2 = c[:, :, 7:8]
    cos0 = c[:, :, 8:9]
    sin0 = c[:, :, 9:10]

    # z_theta = (atan2(y, x) - 0.5*theta0) mod 2*pi, floor-mod (divisor-sign)
    # semantics matching torch float `%`; constant-reciprocal form keeps the
    # EUP free for atan2.
    w = jnp.arctan2(y, x) - half_t0
    z_theta = w - TWO_PI * jnp.floor(w * INV_TWO_PI)

    a2 = x * cos01 + y * sin01
    b2 = x * sin01 - y * cos01
    a3 = x * cos2 + y * sin2
    b3 = y * cos2 - x * sin2
    a4 = x * cos0 + y * sin0
    b4 = x * sin0 - y * cos0

    # Shared compares; the four sectors partition [0, 2*pi), so a 3-deep
    # where chain is equivalent to the reference's masked sum.
    in1 = z_theta < ang1
    in2 = z_theta < ang2
    in3 = z_theta < ang3

    a = jnp.where(in1, x, jnp.where(in2, a2, jnp.where(in3, a3, a4)))
    b = jnp.where(in1, y, jnp.where(in2, b2, jnp.where(in3, b3, b4)))

    o_ref[:, 0, :, :] = a.astype(o_ref.dtype)
    o_ref[:, 1, :, :] = b.astype(o_ref.dtype)


def _pick_tiles(N, C, L, itemsize, target_bytes):
    """Pick (bn, tl) with bn | N and tl | L (tl == L or a multiple of 128) so
    one (bn, C, tl) tile is roughly <= target_bytes.  Keeps the double-buffered
    in+out streams well under v7x's scoped VMEM while staying on the ~85%
    HBM-roofline part of the measured tile-size curve."""
    slab = C * L * itemsize                      # one batch image, both halves
    if slab > target_bytes and L % 128 == 0:
        # shrink the spatial (lane) axis instead of the batch axis
        tl = 128
        d = 128
        while d <= L:
            if L % d == 0 and C * d * itemsize <= target_bytes:
                tl = d
            d += 128
        return 1, tl
    tl = L
    max_bn = max(1, target_bytes // max(slab, 1))
    bn = 1
    for d in range(1, N + 1):
        if N % d == 0 and d <= max_bn:
            bn = d
    return bn, tl


def householder_order_2(z, theta0, theta1, theta2, *,
                        target_tile_bytes=2 * 1024 * 1024):
    """z: (N, C, H, W); thetas: (C//2,). Returns (N, C, H, W)."""
    N, C, H, W = z.shape
    assert C % 2 == 0
    G = C // 2
    L = H * W

    # --- theta-only math hoisted out of the kernel (O(G) work, one tiny DMA) --
    t0 = jnp.clip(theta0.astype(jnp.float32), 0.0, TWO_PI)
    t1 = jnp.clip(theta1.astype(jnp.float32), 0.0, TWO_PI)
    t2 = jnp.clip(theta2.astype(jnp.float32), 0.0, TWO_PI)
    t3 = TWO_PI - t1
    ang1 = 0.5 * t1
    ang2 = 0.5 * (t1 + t2)
    ang3 = 0.5 * (t1 + t2 + t3)                  # == pi + 0.5*t2 (ang4 == 2*pi)
    consts = jnp.stack(
        [0.5 * t0, ang1, ang2, ang3,
         jnp.cos(t0 + t1), jnp.sin(t0 + t1),
         jnp.cos(t2), jnp.sin(t2),
         jnp.cos(t0), jnp.sin(t0)],
        axis=-1,
    )[None].astype(jnp.float32)                  # (1, G, 10)

    # Free reshape: channel axis C -> (2, G) separates the x / y halves without
    # any data movement; the kernel writes a / b into the same layout so the
    # final reshape back to (N, C, H, W) is also free (no split / concat).
    z4 = z.reshape(N, 2, G, L)

    bn, tl = _pick_tiles(N, C, L, z.dtype.itemsize, target_tile_bytes)
    grid = (N // bn, L // tl)

    out = pl.pallas_call(
        _hh2_kernel,
        out_shape=jax.ShapeDtypeStruct((N, 2, G, L), z.dtype),
        grid_spec=pltpu.PrefetchScalarGridSpec(
            num_scalar_prefetch=0,
            grid=grid,
            in_specs=[
                pl.BlockSpec((1, G, _NUM_CONSTS), lambda i, j: (0, 0, 0)),
                pl.BlockSpec((bn, 2, G, tl), lambda i, j: (i, 0, 0, j)),
            ],
            out_specs=pl.BlockSpec((bn, 2, G, tl), lambda i, j: (i, 0, 0, j)),
        ),
        compiler_params=pltpu.CompilerParams(
            dimension_semantics=("parallel", "parallel")),
    )(consts, z4)

    return out.reshape(N, C, H, W)


def _reference(z, theta0, theta1, theta2):
    """Pure-JAX port of the PyTorch forward for verification."""
    N, C, H, W = z.shape
    G = C // 2
    t0 = jnp.clip(theta0, 0.0, TWO_PI).reshape(1, G, 1, 1)
    t1 = jnp.clip(theta1, 0.0, TWO_PI).reshape(1, G, 1, 1)
    t2 = jnp.clip(theta2, 0.0, TWO_PI).reshape(1, G, 1, 1)
    x, y = z[:, :G], z[:, G:]
    z_theta = jnp.mod(jnp.arctan2(y, x) - 0.5 * t0, TWO_PI)
    t3, t4 = TWO_PI - t1, TWO_PI - t2
    ang1 = 0.5 * t1
    ang2 = 0.5 * (t1 + t2)
    ang3 = 0.5 * (t1 + t2 + t3)
    ang4 = 0.5 * (t1 + t2 + t3 + t4)
    s1 = (z_theta >= 0) & (z_theta < ang1)
    s2 = (z_theta >= ang1) & (z_theta < ang2)
    s3 = (z_theta >= ang2) & (z_theta < ang3)
    s4 = (z_theta >= ang3) & (z_theta < ang4)
    a1, b1 = x, y
    a2 = x * jnp.cos(t0 + t1) + y * jnp.sin(t0 + t1)
    b2 = x * jnp.sin(t0 + t1) - y * jnp.cos(t0 + t1)
    a3 = x * jnp.cos(t2) + y * jnp.sin(t2)
    b3 = -x * jnp.sin(t2) + y * jnp.cos(t2)
    a4 = x * jnp.cos(t0) + y * jnp.sin(t0)
    b4 = x * jnp.sin(t0) - y * jnp.cos(t0)
    a = a1 * s1 + a2 * s2 + a3 * s3 + a4 * s4
    b = b1 * s1 + b2 * s2 + b3 * s3 + b4 * s4
    return jnp.concatenate([a, b], axis=1)


if __name__ == "__main__":
    key = jax.random.PRNGKey(0)
    k_z, k0, k1, k2 = jax.random.split(key, 4)

    N, C, H, W = 2, 4, 16, 16
    G = C // 2

    z = jax.random.normal(k_z, (N, C, H, W), dtype=jnp.float32)
    # deterministic parameter init: theta ~ pi * U[0, 1), matching the module's __init__
    theta0 = np.pi * jax.random.uniform(k0, (G,), dtype=jnp.float32)
    theta1 = np.pi * jax.random.uniform(k1, (G,), dtype=jnp.float32)
    theta2 = np.pi * jax.random.uniform(k2, (G,), dtype=jnp.float32)

    out = householder_order_2(z, theta0, theta1, theta2)
    out = jax.block_until_ready(out)

    ref = _reference(z, theta0, theta1, theta2)
    assert out.shape == (N, C, H, W)
    np.testing.assert_allclose(np.asarray(out), np.asarray(ref), rtol=1e-5, atol=1e-5)

    print("KERNEL_OK")
</pallas_src>

<mosaic_0001>
module attributes {stable_mosaic.version = 11 : i64} {
  func.func @_hh2_kernel(%arg0: i32, %arg1: i32, %arg2: memref<1x2x10xf32, #tpu.memory_space<vmem>>, %arg3: memref<2x2x2x256xf32, #tpu.memory_space<vmem>>, %arg4: memref<2x2x2x256xf32, #tpu.memory_space<vmem>>) attributes {dimension_semantics = [#tpu.dimension_semantics<parallel>, #tpu.dimension_semantics<parallel>], iteration_bounds = array<i64: 1, 1>, scalar_prefetch = 0 : i64, scratch_operands = 0 : i64, tpu.core_type = #tpu.core_type<tc>, window_params = [{pipeline_mode = #tpu.pipeline_mode<synchronous>, transform_indices = @transform_0, window_bounds = array<i64: 1, 2, 10>}, {transform_indices = @transform_1, window_bounds = array<i64: 2, 2, 2, 256>}, {transform_indices = @transform_2, window_bounds = array<i64: 2, 2, 2, 256>}]} {
    %c0 = arith.constant 0 : index
    %c0_0 = arith.constant 0 : index
    %c0_1 = arith.constant 0 : index
    %c0_2 = arith.constant 0 : index
    %0 = vector.load %arg3[%c0, %c0_0, %c0_1, %c0_2] : memref<2x2x2x256xf32, #tpu.memory_space<vmem>>, vector<2x1x2x256xf32>
    %1 = vector.shape_cast %0 : vector<2x1x2x256xf32> to vector<2x2x256xf32>
    %c0_3 = arith.constant 0 : index
    %c1 = arith.constant 1 : index
    %c0_4 = arith.constant 0 : index
    %c0_5 = arith.constant 0 : index
    %2 = vector.load %arg3[%c0_3, %c1, %c0_4, %c0_5] : memref<2x2x2x256xf32, #tpu.memory_space<vmem>>, vector<2x1x2x256xf32>
    %3 = vector.shape_cast %2 : vector<2x1x2x256xf32> to vector<2x2x256xf32>
    %c0_6 = arith.constant 0 : index
    %c0_7 = arith.constant 0 : index
    %c0_8 = arith.constant 0 : index
    %4 = vector.load %arg2[%c0_6, %c0_7, %c0_8] : memref<1x2x10xf32, #tpu.memory_space<vmem>>, vector<1x2x10xf32>
    %5 = vector.extract_strided_slice %4 {offsets = [0, 0, 0], sizes = [1, 2, 1], strides = [1, 1, 1]} : vector<1x2x10xf32> to vector<1x2x1xf32>
    %6 = vector.extract_strided_slice %4 {offsets = [0, 0, 1], sizes = [1, 2, 1], strides = [1, 1, 1]} : vector<1x2x10xf32> to vector<1x2x1xf32>
    %7 = vector.extract_strided_slice %4 {offsets = [0, 0, 2], sizes = [1, 2, 1], strides = [1, 1, 1]} : vector<1x2x10xf32> to vector<1x2x1xf32>
    %8 = vector.extract_strided_slice %4 {offsets = [0, 0, 3], sizes = [1, 2, 1], strides = [1, 1, 1]} : vector<1x2x10xf32> to vector<1x2x1xf32>
    %9 = vector.extract_strided_slice %4 {offsets = [0, 0, 4], sizes = [1, 2, 1], strides = [1, 1, 1]} : vector<1x2x10xf32> to vector<1x2x1xf32>
    %10 = vector.extract_strided_slice %4 {offsets = [0, 0, 5], sizes = [1, 2, 1], strides = [1, 1, 1]} : vector<1x2x10xf32> to vector<1x2x1xf32>
    %11 = vector.extract_strided_slice %4 {offsets = [0, 0, 6], sizes = [1, 2, 1], strides = [1, 1, 1]} : vector<1x2x10xf32> to vector<1x2x1xf32>
    %12 = vector.extract_strided_slice %4 {offsets = [0, 0, 7], sizes = [1, 2, 1], strides = [1, 1, 1]} : vector<1x2x10xf32> to vector<1x2x1xf32>
    %13 = vector.extract_strided_slice %4 {offsets = [0, 0, 8], sizes = [1, 2, 1], strides = [1, 1, 1]} : vector<1x2x10xf32> to vector<1x2x1xf32>
    %14 = vector.extract_strided_slice %4 {offsets = [0, 0, 9], sizes = [1, 2, 1], strides = [1, 1, 1]} : vector<1x2x10xf32> to vector<1x2x1xf32>
    %15 = math.atan2 %3, %1 : vector<2x2x256xf32>
    %16 = vector.broadcast %5 : vector<1x2x1xf32> to vector<2x2x256xf32>
    %17 = arith.subf %15, %16 : vector<2x2x256xf32>
    %cst = arith.constant 0.159154937 : f32
    %18 = vector.broadcast %cst : f32 to vector<2x2x256xf32>
    %19 = arith.mulf %17, %18 : vector<2x2x256xf32>
    %20 = math.floor %19 : vector<2x2x256xf32>
    %cst_9 = arith.constant 6.28318548 : f32
    %21 = vector.broadcast %cst_9 : f32 to vector<2x2x256xf32>
    %22 = arith.mulf %21, %20 : vector<2x2x256xf32>
    %23 = arith.subf %17, %22 : vector<2x2x256xf32>
    %24 = vector.broadcast %9 : vector<1x2x1xf32> to vector<2x2x256xf32>
    %25 = arith.mulf %1, %24 : vector<2x2x256xf32>
    %26 = vector.broadcast %10 : vector<1x2x1xf32> to vector<2x2x256xf32>
    %27 = arith.mulf %3, %26 : vector<2x2x256xf32>
    %28 = arith.addf %25, %27 : vector<2x2x256xf32>
    %29 = vector.broadcast %10 : vector<1x2x1xf32> to vector<2x2x256xf32>
    %30 = arith.mulf %1, %29 : vector<2x2x256xf32>
    %31 = vector.broadcast %9 : vector<1x2x1xf32> to vector<2x2x256xf32>
    %32 = arith.mulf %3, %31 : vector<2x2x256xf32>
    %33 = arith.subf %30, %32 : vector<2x2x256xf32>
    %34 = vector.broadcast %11 : vector<1x2x1xf32> to vector<2x2x256xf32>
    %35 = arith.mulf %1, %34 : vector<2x2x256xf32>
    %36 = vector.broadcast %12 : vector<1x2x1xf32> to vector<2x2x256xf32>
    %37 = arith.mulf %3, %36 : vector<2x2x256xf32>
    %38 = arith.addf %35, %37 : vector<2x2x256xf32>
    %39 = vector.broadcast %11 : vector<1x2x1xf32> to vector<2x2x256xf32>
    %40 = arith.mulf %3, %39 : vector<2x2x256xf32>
    %41 = vector.broadcast %12 : vector<1x2x1xf32> to vector<2x2x256xf32>
    %42 = arith.mulf %1, %41 : vector<2x2x256xf32>
    %43 = arith.subf %40, %42 : vector<2x2x256xf32>
    %44 = vector.broadcast %13 : vector<1x2x1xf32> to vector<2x2x256xf32>
    %45 = arith.mulf %1, %44 : vector<2x2x256xf32>
    %46 = vector.broadcast %14 : vector<1x2x1xf32> to vector<2x2x256xf32>
    %47 = arith.mulf %3, %46 : vector<2x2x256xf32>
    %48 = arith.addf %45, %47 : vector<2x2x256xf32>
    %49 = vector.broadcast %14 : vector<1x2x1xf32> to vector<2x2x256xf32>
    %50 = arith.mulf %1, %49 : vector<2x2x256xf32>
    %51 = vector.broadcast %13 : vector<1x2x1xf32> to vector<2x2x256xf32>
    %52 = arith.mulf %3, %51 : vector<2x2x256xf32>
    %53 = arith.subf %50, %52 : vector<2x2x256xf32>
    %54 = vector.broadcast %6 : vector<1x2x1xf32> to vector<2x2x256xf32>
    %55 = arith.cmpf olt, %23, %54 : vector<2x2x256xf32>
    %56 = vector.broadcast %7 : vector<1x2x1xf32> to vector<2x2x256xf32>
    %57 = arith.cmpf olt, %23, %56 : vector<2x2x256xf32>
    %58 = vector.broadcast %8 : vector<1x2x1xf32> to vector<2x2x256xf32>
    %59 = arith.cmpf olt, %23, %58 : vector<2x2x256xf32>
    %60 = arith.select %59, %38, %48 : vector<2x2x256xi1>, vector<2x2x256xf32>
    %61 = arith.select %57, %28, %60 : vector<2x2x256xi1>, vector<2x2x256xf32>
    %62 = arith.select %55, %1, %61 : vector<2x2x256xi1>, vector<2x2x256xf32>
    %63 = arith.select %59, %43, %53 : vector<2x2x256xi1>, vector<2x2x256xf32>
    %64 = arith.select %57, %33, %63 : vector<2x2x256xi1>, vector<2x2x256xf32>
    %65 = arith.select %55, %3, %64 : vector<2x2x256xi1>, vector<2x2x256xf32>
    %c0_10 = arith.constant 0 : index
    %c0_11 = arith.constant 0 : index
    %c0_12 = arith.constant 0 : index
    %c0_13 = arith.constant 0 : index
    %66 = vector.load %arg4[%c0_10, %c0_11, %c0_12, %c0_13] : memref<2x2x2x256xf32, #tpu.memory_space<vmem>>, vector<2x1x2x256xf32>
    %67 = vector.shape_cast %66 : vector<2x1x2x256xf32> to vector<2x2x256xf32>
    %68 = vector.shape_cast %62 : vector<2x2x256xf32> to vector<2x1x2x256xf32>
    tpu.vector_store %arg4[%c0_10, %c0_11, %c0_12, %c0_13], %68 {strides = array<i32>} : memref<2x2x2x256xf32, #tpu.memory_space<vmem>>, vector<2x1x2x256xf32>,
    %c0_14 = arith.constant 0 : index
    %c1_15 = arith.constant 1 : index
    %c0_16 = arith.constant 0 : index
    %c0_17 = arith.constant 0 : index
    %69 = vector.load %arg4[%c0_14, %c1_15, %c0_16, %c0_17] : memref<2x2x2x256xf32, #tpu.memory_space<vmem>>, vector<2x1x2x256xf32>
    %70 = vector.shape_cast %69 : vector<2x1x2x256xf32> to vector<2x2x256xf32>
    %71 = vector.shape_cast %65 : vector<2x2x256xf32> to vector<2x1x2x256xf32>
    tpu.vector_store %arg4[%c0_14, %c1_15, %c0_16, %c0_17], %71 {strides = array<i32>} : memref<2x2x2x256xf32, #tpu.memory_space<vmem>>, vector<2x1x2x256xf32>,
    return
  }
  func.func @transform_0(%arg0: i32, %arg1: i32) -> (i32, i32, i32) {
    %c0_i32 = arith.constant 0 : i32
    %c0_i32_0 = arith.constant 0 : i32
    %c0_i32_1 = arith.constant 0 : i32
    %c0_i32_2 = arith.constant 0 : i32
    return %c0_i32, %c0_i32_0, %c0_i32_1 : i32, i32, i32
  }
  func.func @transform_1(%arg0: i32, %arg1: i32) -> (i32, i32, i32, i32) {
    %c0_i32 = arith.constant 0 : i32
    %c0_i32_0 = arith.constant 0 : i32
    %c0_i32_1 = arith.constant 0 : i32
    return %arg0, %c0_i32, %c0_i32_0, %arg1 : i32, i32, i32, i32
  }
  func.func @transform_2(%arg0: i32, %arg1: i32) -> (i32, i32, i32, i32) {
    %c0_i32 = arith.constant 0 : i32
    %c0_i32_0 = arith.constant 0 : i32
    %c0_i32_1 = arith.constant 0 : i32
    return %arg0, %c0_i32, %c0_i32_0, %arg1 : i32, i32, i32, i32
  }
}

</mosaic_0001>

<llo_original>
// kernel: tpu_custom_call.1
$region0: #{tpu_custom_call.1}
  #allocation0 [shape = 'u32[]', space=smem, size = 0x4, offset = 0x4, fixed_abs, tag = 'smem constant byte address 0x4 - core index']
  #allocation1 [shape = 'u32[72,128]{1,0:T(1,128)}', space=vmem, size = 0x9000, scoped, tag = 'internal scratch']
  %s0 = inlined_call_operand.hbm [shape: f32[1,2,10], index: 0, kind: input, shape index: {}]
  %s1 = inlined_call_operand.hbm [shape: f32[2,2,2,256], index: 1, kind: input, shape index: {}]
  %s2 = inlined_call_operand.hbm [shape: f32[2,2,2,256], index: 2, kind: output, shape index: {}]
  %s3 = sld [smem:[#allocation0]]
  $region26: #{tpu_custom_call.1} parent=0
    _
  %s5 = ssub.s32 1, %s3
  %s6 = scalar_select 0, %s5, %s3
  $region1: #{tpu_custom_call.1} parent=0
    #allocation2 [shape = 'u8[1024]{0}', space=vmem, size = 0x400, scoped, tag = 'input window, operand 0, single buffered']
    #allocation3 [shape = 's32[1]{0}', space=sflag, size = 0x4, scoped, tag = 'scoped memory for tpu_custom_call.1']
    #allocation4 [shape = 's32[1]{0}', space=sflag, size = 0x4, scoped, tag = 'scoped memory for tpu_custom_call.1']
    #allocation5 [shape = 'u8[8192]{0}', space=vmem, size = 0x2000, scoped, tag = 'input window, operand 1, single buffered']
    #allocation6 [shape = 's32[1]{0}', space=sflag, size = 0x4, scoped, tag = 'scoped memory for tpu_custom_call.1']
    #allocation7 [shape = 'u8[8192]{0}', space=vmem, size = 0x2000, scoped, tag = 'output window, operand 0, single buffered']
    %7 = vsyncpa [#allocation3], 0
    %8 = vsyncpa [#allocation6], 0
    %9 = vsyncpa [#allocation4], 0
    // Predicated region
    $region2: #{tpu_custom_call.1} parent=1 // pred_check
      _
    $region3: #{tpu_custom_call.1} parent=1 // pred_check_branch
      %11 = sbr.rel (0) target = $region5
    $region4: #{tpu_custom_call.1} parent=1 // pred_region
      %13 = vsyncadd [#allocation3], 0
      %s15 = sshll.u32 %s0, 4
      %s16 = int_to_ptr.hbm [resolvable:$true] %s15
      %s17 = sshll.u32 [#allocation2], 4
      %s18 = int_to_ptr.vmem [resolvable:$true] %s17
      %20 = dma.hbm_to_vmem [thread:$0]  %s16, 32, %s18, [#allocation3]
    $region5: #{tpu_custom_call.1} parent=1 // pred_fallthru
      _
    // Predicated region
    $region6: #{tpu_custom_call.1} parent=1 // pred_check
      _
    $region7: #{tpu_custom_call.1} parent=1 // pred_check_branch
      %22 = sbr.rel (0) target = $region9
    $region8: #{tpu_custom_call.1} parent=1 // pred_region
      %24 = vsyncadd [#allocation6], 0
      %s25 = sshll.u32 %s1, 4
      %s26 = int_to_ptr.hbm [resolvable:$true] %s25
      %s27 = sshll.u32 [#allocation5], 4
      %s28 = int_to_ptr.vmem [resolvable:$true] %s27
      %33 = dma.hbm_to_vmem [thread:$0]  %s26, 256, %s28, [#allocation6], 64, 64, 4
    $region9: #{tpu_custom_call.1} parent=1 // pred_fallthru
      _
    // Predicated region
    $region10: #{tpu_custom_call.1} parent=1 // pred_check
      _
    $region11: #{tpu_custom_call.1} parent=1 // pred_check_branch
      %35 = sbr.rel (0) target = $region13
    $region12: #{tpu_custom_call.1} parent=1 // pred_region
      %37 = dma.done [#allocation3], 32
    $region13: #{tpu_custom_call.1} parent=1 // pred_fallthru
      _
    // Predicated region
    $region14: #{tpu_custom_call.1} parent=1 // pred_check
      _
    $region15: #{tpu_custom_call.1} parent=1 // pred_check_branch
      %39 = sbr.rel (0) target = $region17
    $region16: #{tpu_custom_call.1} parent=1 // pred_region
      %41 = dma.done [#allocation6], 256
    $region17: #{tpu_custom_call.1} parent=1 // pred_fallthru
      _
    %v42 = vld [vmem:[#allocation5] sm:$0xf]
    %v43 = vld [vmem:[#allocation5 + $0x8] sm:$0xf]
    %s44 = scalar_lea.vmem [#allocation5], 4
    %v45 = vld [vmem:[%s44] sm:$0xf]
    %v46 = vld [vmem:[%s44 + $0x8] sm:$0xf]
    %v47 = vld [vmem:[#allocation2] sm:$0x3]
    %v48 = vand.u32 2147483647, %v42
    %v49 = vand.u32 2147483647, %v45
    %v50 = vmin.f32 %v48, %v49
    %v51 = vmax.f32 %v48, %v49
    %v52 = vrcp.pop %v51
    %v53 = vmul.f32 %v51, %v52
    %v54 = vsub.f32 1.0, %v53
    %v55 = vmul.f32 %v52, %v54
    %v56 = vadd.f32 %v52, %v55
    %vm57 = vweird.f32 %v51
    %vm58 = vweird.f32 %v52
    %vm59 = vmor %vm57, %vm58
    %v60 = vsel %vm59, %v52, %v56
    %v61 = vand.u32 2147483647, %v51
    %vm62 = vcmp.eq.f32.partialorder %v61, 8.507059e+37
    %v63 = vand.u32 %v51, 2147483648
    %v64 = vor.u32 1.1754944e-38, %v63
    %v65 = vsel %vm62, %v64, %v60
    %v66 = vmul.f32 %v50, %v65
    %v67 = vmul.f32 %v66, %v66
    %v68 = vmul.f32 0.002785687, %v67
    %v69 = vadd.f32 %v68, -0.015866
    %v70 = vmul.f32 %v69, %v67
    %v71 = vadd.f32 %v70, 0.04247222
    %v72 = vmul.f32 %v71, %v67
    %v73 = vadd.f32 %v72, -0.074975304
    %v74 = vmul.f32 %v73, %v67
    %v75 = vadd.f32 %v74, 0.1064488
    %v76 = vmul.f32 %v75, %v67
    %v77 = vadd.f32 %v76, -0.14207031
    %v78 = vmul.f32 %v77, %v67
    %v79 = vadd.f32 %v78, 0.19993454
    %v80 = vmul.f32 %v79, %v67
    %v81 = vadd.f32 %v80, -0.33333147
    %v82 = vmul.f32 %v81, %v67
    %v83 = vmul.f32 %v82, %v66
    %v84 = vadd.f32 %v83, %v66
    %vm85 = vcmp.gt.f32.partialorder %v49, %v48
    %v86 = vsub.f32 1.5707964, %v84
    %v87 = vsel %vm85, %v86, %v84
    %vm88 = vcmp.lt.f32.partialorder %v42, 0.0
    %v89 = vsub.f32 3.1415927, %v87
    %v90 = vsel %vm88, %v89, %v87
    %vm91 = vcmp.lt.s32.totalorder %v42, 0
    %v92 = vsel %vm91, 3.1415927, 0.0
    %vm93 = vcmp.eq.f32.partialorder %v45, 0.0
    %v94 = vsel %vm93, %v92, %v90
    %vm95 = vcmp.ne.f32.partialorder %v42, %v42
    %vm96 = vcmp.ne.f32.partialorder %v45, %v45
    %vm97 = vmor %vm95, %vm96
    %v98 = vsel %vm97, nan, %v94
    %vm99 = vcmp.lt.f32.partialorder %v42, 0.0
    %v100 = vsel %vm99, 2.3561945, 0.7853982
    %vm101 = vcmp.eq.s32.totalorder %v48, inf
    %vm102 = vcmp.eq.s32.totalorder %v49, inf
    %vm103 = vmand %vm101, %vm102
    %v104 = vsel %vm103, %v100, %v98
    %v105 = vand.u32 2147483647, %v104
    %v106 = vand.u32 %v45, 2147483648
    %v107 = vor.u32 %v105, %v106
    %v108 = vand.u32 2147483647, %v43
    %v109 = vand.u32 2147483647, %v46
    %v110 = vmin.f32 %v108, %v109
    %v111 = vmax.f32 %v108, %v109
    %v112 = vrcp.pop %v111
    %v113 = vmul.f32 %v111, %v112
    %v114 = vsub.f32 1.0, %v113
    %v115 = vmul.f32 %v112, %v114
    %v116 = vadd.f32 %v112, %v115
    %vm117 = vweird.f32 %v111
    %vm118 = vweird.f32 %v112
    %vm119 = vmor %vm117, %vm118
    %v120 = vsel %vm119, %v112, %v116
    %v121 = vand.u32 2147483647, %v111
    %vm122 = vcmp.eq.f32.partialorder %v121, 8.507059e+37
    %v123 = vand.u32 %v111, 2147483648
    %v124 = vor.u32 1.1754944e-38, %v123
    %v125 = vsel %vm122, %v124, %v120
    %v126 = vmul.f32 %v110, %v125
    %v127 = vmul.f32 %v126, %v126
    %v128 = vmul.f32 0.002785687, %v127
    %v129 = vadd.f32 %v128, -0.015866
    %v130 = vmul.f32 %v129, %v127
    %v131 = vadd.f32 %v130, 0.04247222
    %v132 = vmul.f32 %v131, %v127
    %v133 = vadd.f32 %v132, -0.074975304
    %v134 = vmul.f32 %v133, %v127
    %v135 = vadd.f32 %v134, 0.1064488
    %v136 = vmul.f32 %v135, %v127
    %v137 = vadd.f32 %v136, -0.14207031
    %v138 = vmul.f32 %v137, %v127
    %v139 = vadd.f32 %v138, 0.19993454
    %v140 = vmul.f32 %v139, %v127
    %v141 = vadd.f32 %v140, -0.33333147
    %v142 = vmul.f32 %v141, %v127
    %v143 = vmul.f32 %v142, %v126
    %v144 = vadd.f32 %v143, %v126
    %vm145 = vcmp.gt.f32.partialorder %v109, %v108
    %v146 = vsub.f32 1.5707964, %v144
    %v147 = vsel %vm145, %v146, %v144
    %vm148 = vcmp.lt.f32.partialorder %v43, 0.0
    %v149 = vsub.f32 3.1415927, %v147
    %v150 = vsel %vm148, %v149, %v147
    %vm151 = vcmp.lt.s32.totalorder %v43, 0
    %v152 = vsel %vm151, 3.1415927, 0.0
    %vm153 = vcmp.eq.f32.partialorder %v46, 0.0
    %v154 = vsel %vm153, %v152, %v150
    %vm155 = vcmp.ne.f32.partialorder %v43, %v43
    %vm156 = vcmp.ne.f32.partialorder %v46, %v46
    %vm157 = vmor %vm155, %vm156
    %v158 = vsel %vm157, nan, %v154
    %vm159 = vcmp.lt.f32.partialorder %v43, 0.0
    %v160 = vsel %vm159, 2.3561945, 0.7853982
    %vm161 = vcmp.eq.s32.totalorder %v108, inf
    %vm162 = vcmp.eq.s32.totalorder %v109, inf
    %vm163 = vmand %vm161, %vm162
    %v164 = vsel %vm163, %v160, %v158
    %v165 = vand.u32 2147483647, %v164
    %v166 = vand.u32 %v46, 2147483648
    %v167 = vor.u32 %v165, %v166
    %169 = vset.pattern.permute.xlu0 0
    %170 = vperm.xlu0 %169, %v47
    %v171 = vpop.permute.xlu0 %170
    %v173 = vunpack.c.l.s4 269488144
    %v174 = vunpack.c.0.s8 %v173
    %v175 = vperm.slane %v171, %v174
    %v177 = vsub.f32 %v107, %v175
    %v178 = vsub.f32 %v167, %v175
    %v179 = vmul.f32 %v177, 0.15915494
    %v180 = vmul.f32 %v178, 0.15915494
    %v181 = vfloor.f32 %v179
    %v182 = vfloor.f32 %v180
    %v183 = vmul.f32 %v181, 6.2831855
    %v184 = vmul.f32 %v182, 6.2831855
    %v185 = vsub.f32 %v177, %v183
    %v186 = vsub.f32 %v178, %v184
    %187 = vset.pattern.permute.xlu0 4
    %188 = vperm.xlu0 %187, %v47
    %v189 = vpop.permute.xlu0 %188
    %v191 = vunpack.c.l.s4 269488144
    %v192 = vunpack.c.0.s8 %v191
    %v193 = vperm.slane %v189, %v192
    %v195 = vmul.f32 %v42, %v193
    %v196 = vmul.f32 %v43, %v193
    %197 = vset.pattern.permute.xlu0 5
    %198 = vperm.xlu0 %197, %v47
    %v199 = vpop.permute.xlu0 %198
    %v201 = vunpack.c.l.s4 269488144
    %v202 = vunpack.c.0.s8 %v201
    %v203 = vperm.slane %v199, %v202
    %v205 = vmul.f32 %v45, %v203
    %v206 = vmul.f32 %v46, %v203
    %v207 = vadd.f32 %v195, %v205
    %v208 = vadd.f32 %v196, %v206
    %v209 = vmul.f32 %v42, %v203
    %v210 = vmul.f32 %v43, %v203
    %v211 = vmul.f32 %v45, %v193
    %v212 = vmul.f32 %v46, %v193
    %v213 = vsub.f32 %v209, %v211
    %v214 = vsub.f32 %v210, %v212
    %215 = vset.pattern.permute.xlu0 6
    %216 = vperm.xlu0 %215, %v47
    %v217 = vpop.permute.xlu0 %216
    %v219 = vunpack.c.l.s4 269488144
    %v220 = vunpack.c.0.s8 %v219
    %v221 = vperm.slane %v217, %v220
    %v223 = vmul.f32 %v42, %v221
    %v224 = vmul.f32 %v43, %v221
    %225 = vset.pattern.permute.xlu0 7
    %226 = vperm.xlu0 %225, %v47
    %v227 = vpop.permute.xlu0 %226
    %v229 = vunpack.c.l.s4 269488144
    %v230 = vunpack.c.0.s8 %v229
    %v231 = vperm.slane %v227, %v230
    %v233 = vmul.f32 %v45, %v231
    %v234 = vmul.f32 %v46, %v231
    %v235 = vadd.f32 %v223, %v233
    %v236 = vadd.f32 %v224, %v234
    %v237 = vmul.f32 %v45, %v221
    %v238 = vmul.f32 %v46, %v221
    %v239 = vmul.f32 %v42, %v231
    %v240 = vmul.f32 %v43, %v231
    %v241 = vsub.f32 %v237, %v239
    %v242 = vsub.f32 %v238, %v240
    %243 = vset.pattern.permute.xlu0 8
    %244 = vperm.xlu0 %243, %v47
    %v245 = vpop.permute.xlu0 %244
    %v247 = vunpack.c.l.s4 269488144
    %v248 = vunpack.c.0.s8 %v247
    %v249 = vperm.slane %v245, %v248
    %v251 = vmul.f32 %v42, %v249
    %v252 = vmul.f32 %v43, %v249
    %253 = vset.pattern.permute.xlu0 9
    %254 = vperm.xlu0 %253, %v47
    %v255 = vpop.permute.xlu0 %254
    %v257 = vunpack.c.l.s4 269488144
    %v258 = vunpack.c.0.s8 %v257
    %v259 = vperm.slane %v255, %v258
    %v261 = vmul.f32 %v45, %v259
    %v262 = vmul.f32 %v46, %v259
    %v263 = vadd.f32 %v251, %v261
    %v264 = vadd.f32 %v252, %v262
    %v265 = vmul.f32 %v42, %v259
    %v266 = vmul.f32 %v43, %v259
    %v267 = vmul.f32 %v45, %v249
    %v268 = vmul.f32 %v46, %v249
    %v269 = vsub.f32 %v265, %v267
    %v270 = vsub.f32 %v266, %v268
    %271 = vset.pattern.permute.xlu0 1
    %272 = vperm.xlu0 %271, %v47
    %v273 = vpop.permute.xlu0 %272
    %v275 = vunpack.c.l.s4 269488144
    %v276 = vunpack.c.0.s8 %v275
    %v277 = vperm.slane %v273, %v276
    %vm279 = vcmp.lt.f32.partialorder %v185, %v277
    %vm280 = vcmp.lt.f32.partialorder %v186, %v277
    %281 = vset.pattern.permute.xlu0 2
    %282 = vperm.xlu0 %281, %v47
    %v283 = vpop.permute.xlu0 %282
    %v285 = vunpack.c.l.s4 269488144
    %v286 = vunpack.c.0.s8 %v285
    %v287 = vperm.slane %v283, %v286
    %vm289 = vcmp.lt.f32.partialorder %v185, %v287
    %vm290 = vcmp.lt.f32.partialorder %v186, %v287
    %291 = vset.pattern.permute.xlu0 3
    %292 = vperm.xlu0 %291, %v47
    %v293 = vpop.permute.xlu0 %292
    %v295 = vunpack.c.l.s4 269488144
    %v296 = vunpack.c.0.s8 %v295
    %v297 = vperm.slane %v293, %v296
    %vm299 = vcmp.lt.f32.partialorder %v185, %v297
    %vm300 = vcmp.lt.f32.partialorder %v186, %v297
    %v301 = vsel %vm299, %v235, %v263
    %v302 = vsel %vm300, %v236, %v264
    %v303 = vsel %vm289, %v207, %v301
    %v304 = vsel %vm290, %v208, %v302
    %v305 = vsel %vm279, %v42, %v303
    %v306 = vsel %vm280, %v43, %v304
    %v307 = vsel %vm299, %v241, %v269
    %v308 = vsel %vm300, %v242, %v270
    %v309 = vsel %vm289, %v213, %v307
    %v310 = vsel %vm290, %v214, %v308
    %v311 = vsel %vm279, %v45, %v309
    %v312 = vsel %vm280, %v46, %v310
    %313 = vst [vmem:[#allocation7] sm:$0xf] %v305
    %314 = vst [vmem:[#allocation7 + $0x8] sm:$0xf] %v306
    %s315 = scalar_lea.vmem [#allocation7], 4
    %316 = vst [vmem:[%s315] sm:$0xf] %v311
    %317 = vst [vmem:[%s315 + $0x8] sm:$0xf] %v312
    // Predicated region
    $region18: #{tpu_custom_call.1} parent=1 // pred_check
      _
    $region19: #{tpu_custom_call.1} parent=1 // pred_check_branch
      %319 = sbr.rel (0) target = $region21
    $region20: #{tpu_custom_call.1} parent=1 // pred_region
      %321 = vsyncadd [#allocation4], 0
      %s322 = sshll.u32 [#allocation7], 4
      %s323 = int_to_ptr.vmem [resolvable:$true] %s322
      %s324 = sshll.u32 %s2, 4
      %s325 = int_to_ptr.hbm [resolvable:$true] %s324
      %330 = dma.vmem_to_hbm [thread:$0]  %s323, 256, %s325, [#allocation4], 64, 64, 4
    $region21: #{tpu_custom_call.1} parent=1 // pred_fallthru
      _
    // Predicated region
    $region22: #{tpu_custom_call.1} parent=1 // pred_check
      _
    $region23: #{tpu_custom_call.1} parent=1 // pred_check_branch
      %332 = sbr.rel (0) target = $region25
    $region24: #{tpu_custom_call.1} parent=1 // pred_region
      %334 = dma.done [#allocation4], 256
    $region25: #{tpu_custom_call.1} parent=1 // pred_fallthru
      _
    %335 = vsyncpa [#allocation3], 1
    %336 = vsyncpa [#allocation6], 1
    %337 = vsyncpa [#allocation4], 1

</llo_original>
